<compile_context>
chip_gen: v6e
topology: v6e:2x2x1
jax: 0.10.0
libtpu: 0.0.40
codegen_flags: <defaults>
</compile_context>

<pallas_src>
import math

import jax
import jax.numpy as jnp
from jax.experimental import pallas as pl
from jax.experimental.pallas import tpu as pltpu


# ----------------------- Pallas kernel -----------------------

def _acr_kernel(coords_ref, coef_ref, tmpl_ref, sel_ref, out_ref):
    # coords_ref: (2, P)      f32  row0 = x(p), row1 = y(p)   (align_corners=False base grid)
    # coef_ref  : (N*T, 8)    f32  [ax, bx, cx, ay, by, cy, 0, 0] per row r = n*T + tap
    # tmpl_ref  : (N*T, N*T)  f32  block-diagonal processed templates
    # sel_ref   : (N, N*T)    f32  block row-sum selector with intensity folded in
    # out_ref   : (N, P)      f32  transformed templates, lane-dense
    nt = coef_ref.shape[0]
    p = coords_ref.shape[1]

    # Hoisted sublane broadcasts of the pixel coordinates (used by wx and wy).
    xb = jnp.broadcast_to(coords_ref[0:1, :], (nt, p))          # (N*T, P)
    yb = jnp.broadcast_to(coords_ref[1:2, :], (nt, p))          # (N*T, P)

    ax = coef_ref[:, 0:1]
    bx = coef_ref[:, 1:2]
    cx = coef_ref[:, 2:3]
    ay = coef_ref[:, 3:4]
    by = coef_ref[:, 4:5]
    cy = coef_ref[:, 5:6]

    # Bilinear tent weights for every (batch*channel, tap) row at once.
    # arg = ix(n, p) - tap  (resp. iy), so max(0, 1 - |arg|) reproduces
    # grid_sample(bilinear, padding_mode='zeros', align_corners=False).
    wx = jnp.maximum(0.0, 1.0 - jnp.abs(ax * xb + bx * yb + cx))   # (N*T, P)
    wy = jnp.maximum(0.0, 1.0 - jnp.abs(ay * xb + by * yb + cy))   # (N*T, P)

    # One block-diagonal MXU call: m[n*T+i, p] = sum_j tmpl[n][i, j] * wx[n*T+j, p]
    m = jnp.dot(tmpl_ref[...], wx, preferred_element_type=jnp.float32)

    # Second MXU call folds the tap-i reduction AND the intensity scale:
    # out[n, p] = intensity[n] * sum_i wy[n*T+i, p] * m[n*T+i, p]
    out_ref[...] = jnp.dot(sel_ref[...], wy * m,
                           preferred_element_type=jnp.float32)


# ----------------------- JAX glue -----------------------

def geometric_transform_2x3(pose):
    """pose: (N, 6) -> (N, 2, 3); matches SCAE geometric_transform
    (similarity=False, nonlinear=True, as_matrix=True)[:, :2]."""
    sx, sy, theta, shear, tx, ty = [pose[:, i] for i in range(6)]
    sx = jax.nn.sigmoid(sx) + 1e-2
    sy = jax.nn.sigmoid(sy) + 1e-2
    tx = jnp.tanh(tx * 5.0)
    ty = jnp.tanh(ty * 5.0)
    shear = jnp.tanh(shear * 5.0)
    theta = theta * (2.0 * math.pi)
    c, s = jnp.cos(theta), jnp.sin(theta)
    row0 = jnp.stack([sx * c + shear * sy * s, -sx * s + shear * sy * c, tx], -1)
    row1 = jnp.stack([sy * s, sy * c, ty], -1)
    return jnp.stack([row0, row1], axis=1)


def acr_forward(template_param, pose, intensity, image_size):
    """template_param: (1, C, T, T); pose: (B, C, 6); intensity: (B, C, 1)."""
    _, C, T, _ = template_param.shape
    B = pose.shape[0]
    N = B * C
    NT = N * T
    H = W = image_size
    P = H * W

    f32 = jnp.float32

    # Processed templates: tanh + scaled softplus (tiny; XLA fuses it).
    t = jnp.tanh(template_param.astype(f32))
    template_ = jnp.log1p(jnp.exp(t * 10.0)) / 10.0                  # (1, C, T, T)

    # Pose -> 2x3 affine matrices (cheap glue).
    theta = geometric_transform_2x3(pose.reshape(N, 6).astype(f32))  # (N, 2, 3)

    # Fold affine_grid + grid_sample unnormalization + per-tap offset into
    # per-row tent-weight coefficients:  ix(n,p) - j = A*x(p) + Bc*y(p) + Cc
    # with ix = (T/2)*gx + (T-1)/2, gx = t00*x + t01*y + t02.
    half_t = 0.5 * T
    taps = jnp.tile(jnp.arange(T, dtype=f32), N)                     # (NT,)
    ax = jnp.repeat(theta[:, 0, 0] * half_t, T)
    bx = jnp.repeat(theta[:, 0, 1] * half_t, T)
    cx = jnp.repeat(theta[:, 0, 2] * half_t + (T - 1) * 0.5, T) - taps
    ay = jnp.repeat(theta[:, 1, 0] * half_t, T)
    by = jnp.repeat(theta[:, 1, 1] * half_t, T)
    cy = jnp.repeat(theta[:, 1, 2] * half_t + (T - 1) * 0.5, T) - taps
    zeros = jnp.zeros_like(ax)
    coef = jnp.stack([ax, bx, cx, ay, by, cy, zeros, zeros], axis=-1)  # (NT, 8)

    # Pixel coordinates, affine_grid base with align_corners=False.
    pidx = jnp.arange(P)
    xcoord = (2.0 * (pidx % W).astype(f32) + 1.0) / float(W) - 1.0
    ycoord = (2.0 * (pidx // W).astype(f32) + 1.0) / float(H) - 1.0
    coords = jnp.stack([xcoord, ycoord], axis=0)                     # (2, P)

    # Block-diagonal template LHS (NT, NT): block n is tmpl[c(n)].
    tmpl_n = jnp.tile(template_.reshape(C, T, T), (B, 1, 1))         # (N, T, T)
    eye_n = jnp.eye(N, dtype=f32)
    tmpl_bd = (eye_n[:, None, :, None] * tmpl_n[:, :, None, :]).reshape(NT, NT)

    # Selector (N, NT): sel[n, m*T+i] = intensity[n] * delta(n, m).
    inten = intensity.reshape(N).astype(f32)
    sel = jnp.repeat(eye_n * inten[:, None], T, axis=1)              # (N, NT)

    out_flat = pl.pallas_call(
        _acr_kernel,
        out_shape=jax.ShapeDtypeStruct((N, P), f32),
        grid=(1,),
        in_specs=[
            pl.BlockSpec((2, P), lambda i: (0, 0)),
            pl.BlockSpec((NT, 8), lambda i: (0, 0)),
            pl.BlockSpec((NT, NT), lambda i: (0, 0)),
            pl.BlockSpec((N, NT), lambda i: (0, 0)),
        ],
        out_specs=pl.BlockSpec((N, P), lambda i: (0, 0)),
        compiler_params=pltpu.CompilerParams(
            dimension_semantics=("arbitrary",),
        ),
    )(coords, coef, tmpl_bd, sel)

    transformed = out_flat.reshape(B, C, H, W)
    return {"templates": template_, "transformed_templates": transformed}


# ----------------------- main -----------------------

if __name__ == "__main__":
    key = jax.random.PRNGKey(0)
    B, n_templates, template_size, image_size = 2, 4, 8, 16
    k1, k2, k3 = jax.random.split(key, 3)

    # Deterministic orthogonal init (same spirit as nn.init.orthogonal_ on the
    # (n_templates, T*T) view): orthonormal rows via QR of a random matrix.
    a = jax.random.normal(k1, (template_size * template_size, n_templates),
                          jnp.float32)
    q, r = jnp.linalg.qr(a)
    d = jnp.where(jnp.diag(r) >= 0.0, 1.0, -1.0)
    template_param = (q * d[None, :]).T.reshape(
        1, n_templates, template_size, template_size)

    pose = jax.random.normal(k2, (B, n_templates, 6), jnp.float32)
    intensity = jax.random.uniform(k3, (B, n_templates, 1), jnp.float32)

    out = acr_forward(template_param, pose, intensity, image_size)
    jax.block_until_ready(out["transformed_templates"])
    jax.block_until_ready(out["templates"])
    print("KERNEL_OK")
</pallas_src>

<mosaic_0001>
module attributes {stable_mosaic.version = 11 : i64} {
  func.func @_acr_kernel(%arg0: i32, %arg1: memref<2x256xf32, #tpu.memory_space<vmem>>, %arg2: memref<64x8xf32, #tpu.memory_space<vmem>>, %arg3: memref<64x64xf32, #tpu.memory_space<vmem>>, %arg4: memref<8x64xf32, #tpu.memory_space<vmem>>, %arg5: memref<8x256xf32, #tpu.memory_space<vmem>>) attributes {dimension_semantics = [#tpu.dimension_semantics<arbitrary>], iteration_bounds = array<i64: 1>, scalar_prefetch = 0 : i64, scratch_operands = 0 : i64, tpu.core_type = #tpu.core_type<tc>, window_params = [{pipeline_mode = #tpu.pipeline_mode<synchronous>, transform_indices = @transform_0, window_bounds = array<i64: 2, 256>}, {pipeline_mode = #tpu.pipeline_mode<synchronous>, transform_indices = @transform_1, window_bounds = array<i64: 64, 8>}, {pipeline_mode = #tpu.pipeline_mode<synchronous>, transform_indices = @transform_2, window_bounds = array<i64: 64, 64>}, {pipeline_mode = #tpu.pipeline_mode<synchronous>, transform_indices = @transform_3, window_bounds = array<i64: 8, 64>}, {pipeline_mode = #tpu.pipeline_mode<synchronous>, transform_indices = @transform_4, window_bounds = array<i64: 8, 256>}]} {
    %c0 = arith.constant 0 : index
    %c0_0 = arith.constant 0 : index
    %0 = vector.load %arg1[%c0, %c0_0] : memref<2x256xf32, #tpu.memory_space<vmem>>, vector<1x256xf32>
    %1 = vector.shape_cast %0 : vector<1x256xf32> to vector<1x256xf32>
    %2 = vector.broadcast %1 : vector<1x256xf32> to vector<64x256xf32>
    %c1 = arith.constant 1 : index
    %c0_1 = arith.constant 0 : index
    %3 = vector.load %arg1[%c1, %c0_1] : memref<2x256xf32, #tpu.memory_space<vmem>>, vector<1x256xf32>
    %4 = vector.shape_cast %3 : vector<1x256xf32> to vector<1x256xf32>
    %5 = vector.broadcast %4 : vector<1x256xf32> to vector<64x256xf32>
    %c0_2 = arith.constant 0 : index
    %c0_3 = arith.constant 0 : index
    %6 = vector.load %arg2[%c0_2, %c0_3] : memref<64x8xf32, #tpu.memory_space<vmem>>, vector<64x1xf32>
    %c0_4 = arith.constant 0 : index
    %c1_5 = arith.constant 1 : index
    %7 = vector.load %arg2[%c0_4, %c1_5] : memref<64x8xf32, #tpu.memory_space<vmem>>, vector<64x1xf32>
    %c0_6 = arith.constant 0 : index
    %c2 = arith.constant 2 : index
    %8 = vector.load %arg2[%c0_6, %c2] : memref<64x8xf32, #tpu.memory_space<vmem>>, vector<64x1xf32>
    %c0_7 = arith.constant 0 : index
    %c3 = arith.constant 3 : index
    %9 = vector.load %arg2[%c0_7, %c3] : memref<64x8xf32, #tpu.memory_space<vmem>>, vector<64x1xf32>
    %c0_8 = arith.constant 0 : index
    %c4 = arith.constant 4 : index
    %10 = vector.load %arg2[%c0_8, %c4] : memref<64x8xf32, #tpu.memory_space<vmem>>, vector<64x1xf32>
    %c0_9 = arith.constant 0 : index
    %c5 = arith.constant 5 : index
    %11 = vector.load %arg2[%c0_9, %c5] : memref<64x8xf32, #tpu.memory_space<vmem>>, vector<64x1xf32>
    %12 = vector.broadcast %6 : vector<64x1xf32> to vector<64x256xf32>
    %13 = arith.mulf %12, %2 : vector<64x256xf32>
    %14 = vector.broadcast %7 : vector<64x1xf32> to vector<64x256xf32>
    %15 = arith.mulf %14, %5 : vector<64x256xf32>
    %16 = arith.addf %13, %15 : vector<64x256xf32>
    %17 = vector.broadcast %8 : vector<64x1xf32> to vector<64x256xf32>
    %18 = arith.addf %16, %17 : vector<64x256xf32>
    %19 = math.absf %18 : vector<64x256xf32>
    %cst = arith.constant 1.000000e+00 : f32
    %20 = vector.broadcast %cst : f32 to vector<64x256xf32>
    %21 = arith.subf %20, %19 : vector<64x256xf32>
    %cst_10 = arith.constant 0.000000e+00 : f32
    %22 = vector.broadcast %cst_10 : f32 to vector<64x256xf32>
    %23 = arith.maximumf %22, %21 : vector<64x256xf32>
    %24 = vector.broadcast %9 : vector<64x1xf32> to vector<64x256xf32>
    %25 = arith.mulf %24, %2 : vector<64x256xf32>
    %26 = vector.broadcast %10 : vector<64x1xf32> to vector<64x256xf32>
    %27 = arith.mulf %26, %5 : vector<64x256xf32>
    %28 = arith.addf %25, %27 : vector<64x256xf32>
    %29 = vector.broadcast %11 : vector<64x1xf32> to vector<64x256xf32>
    %30 = arith.addf %28, %29 : vector<64x256xf32>
    %31 = math.absf %30 : vector<64x256xf32>
    %cst_11 = arith.constant 1.000000e+00 : f32
    %32 = vector.broadcast %cst_11 : f32 to vector<64x256xf32>
    %33 = arith.subf %32, %31 : vector<64x256xf32>
    %cst_12 = arith.constant 0.000000e+00 : f32
    %34 = vector.broadcast %cst_12 : f32 to vector<64x256xf32>
    %35 = arith.maximumf %34, %33 : vector<64x256xf32>
    %c0_13 = arith.constant 0 : index
    %c0_14 = arith.constant 0 : index
    %36 = vector.load %arg3[%c0_13, %c0_14] : memref<64x64xf32, #tpu.memory_space<vmem>>, vector<64x64xf32>
    %cst_15 = arith.constant dense<0.000000e+00> : vector<64x256xf32>
    %37 = tpu.matmul %36, %23, %cst_15 {dimension_numbers = #tpu.dot_dimension_numbers<[1], [0], [0], [1], [0, 0, 1, 1], [], []>} : vector<64x64xf32>, vector<64x256xf32>, vector<64x256xf32> -> vector<64x256xf32>
    %c0_16 = arith.constant 0 : index
    %c0_17 = arith.constant 0 : index
    %38 = vector.load %arg4[%c0_16, %c0_17] : memref<8x64xf32, #tpu.memory_space<vmem>>, vector<8x64xf32>
    %39 = arith.mulf %35, %37 : vector<64x256xf32>
    %cst_18 = arith.constant dense<0.000000e+00> : vector<8x256xf32>
    %40 = tpu.matmul %38, %39, %cst_18 {dimension_numbers = #tpu.dot_dimension_numbers<[1], [0], [0], [1], [0, 0, 1, 1], [], []>} : vector<8x64xf32>, vector<64x256xf32>, vector<8x256xf32> -> vector<8x256xf32>
    %c0_19 = arith.constant 0 : index
    %c0_20 = arith.constant 0 : index
    %41 = vector.load %arg5[%c0_19, %c0_20] : memref<8x256xf32, #tpu.memory_space<vmem>>, vector<8x256xf32>
    tpu.vector_store %arg5[%c0_19, %c0_20], %40 {strides = array<i32>} : memref<8x256xf32, #tpu.memory_space<vmem>>, vector<8x256xf32>,
    return
  }
  func.func @transform_0(%arg0: i32) -> (i32, i32) {
    %c0_i32 = arith.constant 0 : i32
    %c0_i32_0 = arith.constant 0 : i32
    %c0_i32_1 = arith.constant 0 : i32
    return %c0_i32, %c0_i32_0 : i32, i32
  }
  func.func @transform_1(%arg0: i32) -> (i32, i32) {
    %c0_i32 = arith.constant 0 : i32
    %c0_i32_0 = arith.constant 0 : i32
    %c0_i32_1 = arith.constant 0 : i32
    return %c0_i32, %c0_i32_0 : i32, i32
  }
  func.func @transform_2(%arg0: i32) -> (i32, i32) {
    %c0_i32 = arith.constant 0 : i32
    %c0_i32_0 = arith.constant 0 : i32
    %c0_i32_1 = arith.constant 0 : i32
    return %c0_i32, %c0_i32_0 : i32, i32
  }
  func.func @transform_3(%arg0: i32) -> (i32, i32) {
    %c0_i32 = arith.constant 0 : i32
    %c0_i32_0 = arith.constant 0 : i32
    %c0_i32_1 = arith.constant 0 : i32
    return %c0_i32, %c0_i32_0 : i32, i32
  }
  func.func @transform_4(%arg0: i32) -> (i32, i32) {
    %c0_i32 = arith.constant 0 : i32
    %c0_i32_0 = arith.constant 0 : i32
    %c0_i32_1 = arith.constant 0 : i32
    return %c0_i32, %c0_i32_0 : i32, i32
  }
}

</mosaic_0001>

<llo_original>
// kernel: tpu_custom_call.1
$region0: #{tpu_custom_call.1}
  #allocation0 [shape = 'u32[]', space=smem, size = 0x4, offset = 0x4, fixed_abs, tag = 'smem constant byte address 0x4 - core index']
  #allocation1 [shape = 'u32[144,128]{1,0:T(1,128)}', space=vmem, size = 0x12000, scoped, tag = 'internal scratch']
  %s0 = inlined_call_operand.hbm [shape: f32[2,256], index: 0, kind: input, shape index: {}]
  %s1 = inlined_call_operand.vmem [shape: f32[64,8], index: 1, kind: input, shape index: {}]
  %s2 = inlined_call_operand.vmem [shape: f32[64,64], index: 2, kind: input, shape index: {}]
  %s3 = inlined_call_operand.vmem [shape: f32[8,64], index: 3, kind: input, shape index: {}]
  %s4 = inlined_call_operand.hbm [shape: f32[8,256], index: 4, kind: output, shape index: {}]
  %s5 = sld [smem:[#allocation0]]
  $region30: #{tpu_custom_call.1} parent=0
    _
  %s7 = ssub.s32 1, %s5
  %s8 = scalar_select 0, %s7, %s5
  $region1: #{tpu_custom_call.1} parent=0
    #allocation2 [shape = 'u8[2048]{0}', space=vmem, size = 0x800, scoped, tag = 'input window, operand 0, single buffered']
    #allocation3 [shape = 's32[1]{0}', space=sflag, size = 0x4, scoped, tag = 'scoped memory for tpu_custom_call.1']
    #allocation4 [shape = 's32[1]{0}', space=sflag, size = 0x4, scoped, tag = 'scoped memory for tpu_custom_call.1']
    #allocation5 [shape = 'u8[8192]{0}', space=vmem, size = 0x2000, scoped, tag = 'output window, operand 0, single buffered']
    %9 = vsyncpa [#allocation3], 0
    %10 = vsyncpa [#allocation4], 0
    // Predicated region
    $region2: #{tpu_custom_call.1} parent=1 // pred_check
      _
    $region3: #{tpu_custom_call.1} parent=1 // pred_check_branch
      %12 = sbr.rel (0) target = $region5
    $region4: #{tpu_custom_call.1} parent=1 // pred_region
      %s14 = ssub.s32 64, 64
      %15 = vsyncadd [#allocation3], %s14
      %s17 = sshll.u32 [#allocation2], 4
      %s18 = int_to_ptr.vmem [resolvable:$true] %s17
      %20 = dma.hbm_to_vmem [thread:$0]  %s0, 64, %s18, [#allocation3]
    $region5: #{tpu_custom_call.1} parent=1 // pred_fallthru
      _
    // Predicated region
    $region6: #{tpu_custom_call.1} parent=1 // pred_check
      _
    $region7: #{tpu_custom_call.1} parent=1 // pred_check_branch
      %22 = sbr.rel (0) target = $region9
    $region8: #{tpu_custom_call.1} parent=1 // pred_region
      _
    $region9: #{tpu_custom_call.1} parent=1 // pred_fallthru
      _
    // Predicated region
    $region10: #{tpu_custom_call.1} parent=1 // pred_check
      _
    $region11: #{tpu_custom_call.1} parent=1 // pred_check_branch
      %24 = sbr.rel (0) target = $region13
    $region12: #{tpu_custom_call.1} parent=1 // pred_region
      _
    $region13: #{tpu_custom_call.1} parent=1 // pred_fallthru
      _
    // Predicated region
    $region14: #{tpu_custom_call.1} parent=1 // pred_check
      _
    $region15: #{tpu_custom_call.1} parent=1 // pred_check_branch
      %26 = sbr.rel (0) target = $region17
    $region16: #{tpu_custom_call.1} parent=1 // pred_region
      _
    $region17: #{tpu_custom_call.1} parent=1 // pred_fallthru
      _
    // Predicated region
    $region18: #{tpu_custom_call.1} parent=1 // pred_check
      _
    $region19: #{tpu_custom_call.1} parent=1 // pred_check_branch
      %28 = sbr.rel (0) target = $region21
    $region20: #{tpu_custom_call.1} parent=1 // pred_region
      %29 = dma.done [#allocation3], 64
    $region21: #{tpu_custom_call.1} parent=1 // pred_fallthru
      _
    %v30 = vld [vmem:[#allocation2] ss:$2 sm:$0x3]
    %v32 = vlaneseq
    %v33 = vshrl.u32 %v32, 7
    %v34 = vsub.s32 0, %v33
    %v35 = vrot.slane %v30, %v34
    %v36 = vlaneseq
    %v37 = vshrl.u32 %v36, 7
    %v38 = vsub.s32 1, %v37
    %v39 = vrot.slane %v30, %v38
    %s42 = scalar_lea.vmem [#allocation2], 1
    %v43 = vld [vmem:[%s42] ss:$2 sm:$0x3]
    %v45 = vlaneseq
    %v46 = vshrl.u32 %v45, 7
    %v47 = vsub.s32 0, %v46
    %v48 = vrot.slane %v43, %v47
    %v49 = vlaneseq
    %v50 = vshrl.u32 %v49, 7
    %v51 = vsub.s32 1, %v50
    %v52 = vrot.slane %v43, %v51
    %v55 = vld [vmem:[%s1] sm:$0xff]
    %v56 = vld [vmem:[%s1 + $0x8] sm:$0xff]
    %v57 = vld [vmem:[%s1 + $0x10] sm:$0xff]
    %v58 = vld [vmem:[%s1 + $0x18] sm:$0xff]
    %v59 = vld [vmem:[%s1 + $0x20] sm:$0xff]
    %v60 = vld [vmem:[%s1 + $0x28] sm:$0xff]
    %v61 = vld [vmem:[%s1 + $0x30] sm:$0xff]
    %v62 = vld [vmem:[%s1 + $0x38] sm:$0xff]
    %64 = vset.pattern.permute.xlu0 0
    %65 = vperm.xlu0 %64, %v55
    %v66 = vpop.permute.xlu0 %65
    %69 = vset.pattern.permute.xlu0 0
    %70 = vperm.xlu0 %69, %v56
    %v71 = vpop.permute.xlu0 %70
    %74 = vset.pattern.permute.xlu0 0
    %75 = vperm.xlu0 %74, %v57
    %v76 = vpop.permute.xlu0 %75
    %79 = vset.pattern.permute.xlu0 0
    %80 = vperm.xlu0 %79, %v58
    %v81 = vpop.permute.xlu0 %80
    %84 = vset.pattern.permute.xlu0 0
    %85 = vperm.xlu0 %84, %v59
    %v86 = vpop.permute.xlu0 %85
    %89 = vset.pattern.permute.xlu0 0
    %90 = vperm.xlu0 %89, %v60
    %v91 = vpop.permute.xlu0 %90
    %94 = vset.pattern.permute.xlu0 0
    %95 = vperm.xlu0 %94, %v61
    %v96 = vpop.permute.xlu0 %95
    %99 = vset.pattern.permute.xlu0 0
    %100 = vperm.xlu0 %99, %v62
    %v101 = vpop.permute.xlu0 %100
    %v103 = vmul.f32 %v66, %v35
    %v104 = vmul.f32 %v66, %v39
    %v105 = vmul.f32 %v71, %v35
    %v106 = vmul.f32 %v71, %v39
    %v107 = vmul.f32 %v76, %v35
    %v108 = vmul.f32 %v76, %v39
    %v109 = vmul.f32 %v81, %v35
    %v110 = vmul.f32 %v81, %v39
    %v111 = vmul.f32 %v86, %v35
    %v112 = vmul.f32 %v86, %v39
    %v113 = vmul.f32 %v91, %v35
    %v114 = vmul.f32 %v91, %v39
    %v115 = vmul.f32 %v96, %v35
    %v116 = vmul.f32 %v96, %v39
    %v117 = vmul.f32 %v101, %v35
    %v118 = vmul.f32 %v101, %v39
    %119 = vset.pattern.permute.xlu0 1
    %120 = vperm.xlu0 %119, %v55
    %v121 = vpop.permute.xlu0 %120
    %123 = vset.pattern.permute.xlu0 1
    %124 = vperm.xlu0 %123, %v56
    %v125 = vpop.permute.xlu0 %124
    %127 = vset.pattern.permute.xlu0 1
    %128 = vperm.xlu0 %127, %v57
    %v129 = vpop.permute.xlu0 %128
    %131 = vset.pattern.permute.xlu0 1
    %132 = vperm.xlu0 %131, %v58
    %v133 = vpop.permute.xlu0 %132
    %135 = vset.pattern.permute.xlu0 1
    %136 = vperm.xlu0 %135, %v59
    %v137 = vpop.permute.xlu0 %136
    %139 = vset.pattern.permute.xlu0 1
    %140 = vperm.xlu0 %139, %v60
    %v141 = vpop.permute.xlu0 %140
    %143 = vset.pattern.permute.xlu0 1
    %144 = vperm.xlu0 %143, %v61
    %v145 = vpop.permute.xlu0 %144
    %147 = vset.pattern.permute.xlu0 1
    %148 = vperm.xlu0 %147, %v62
    %v149 = vpop.permute.xlu0 %148
    %v151 = vmul.f32 %v121, %v48
    %v152 = vmul.f32 %v121, %v52
    %v153 = vmul.f32 %v125, %v48
    %v154 = vmul.f32 %v125, %v52
    %v155 = vmul.f32 %v129, %v48
    %v156 = vmul.f32 %v129, %v52
    %v157 = vmul.f32 %v133, %v48
    %v158 = vmul.f32 %v133, %v52
    %v159 = vmul.f32 %v137, %v48
    %v160 = vmul.f32 %v137, %v52
    %v161 = vmul.f32 %v141, %v48
    %v162 = vmul.f32 %v141, %v52
    %v163 = vmul.f32 %v145, %v48
    %v164 = vmul.f32 %v145, %v52
    %v165 = vmul.f32 %v149, %v48
    %v166 = vmul.f32 %v149, %v52
    %v167 = vadd.f32 %v103, %v151
    %v168 = vadd.f32 %v104, %v152
    %v169 = vadd.f32 %v105, %v153
    %v170 = vadd.f32 %v106, %v154
    %v171 = vadd.f32 %v107, %v155
    %v172 = vadd.f32 %v108, %v156
    %v173 = vadd.f32 %v109, %v157
    %v174 = vadd.f32 %v110, %v158
    %v175 = vadd.f32 %v111, %v159
    %v176 = vadd.f32 %v112, %v160
    %v177 = vadd.f32 %v113, %v161
    %v178 = vadd.f32 %v114, %v162
    %v179 = vadd.f32 %v115, %v163
    %v180 = vadd.f32 %v116, %v164
    %v181 = vadd.f32 %v117, %v165
    %v182 = vadd.f32 %v118, %v166
    %183 = vset.pattern.permute.xlu0 2
    %184 = vperm.xlu0 %183, %v55
    %v185 = vpop.permute.xlu0 %184
    %187 = vset.pattern.permute.xlu0 2
    %188 = vperm.xlu0 %187, %v56
    %v189 = vpop.permute.xlu0 %188
    %191 = vset.pattern.permute.xlu0 2
    %192 = vperm.xlu0 %191, %v57
    %v193 = vpop.permute.xlu0 %192
    %195 = vset.pattern.permute.xlu0 2
    %196 = vperm.xlu0 %195, %v58
    %v197 = vpop.permute.xlu0 %196
    %199 = vset.pattern.permute.xlu0 2
    %200 = vperm.xlu0 %199, %v59
    %v201 = vpop.permute.xlu0 %200
    %203 = vset.pattern.permute.xlu0 2
    %204 = vperm.xlu0 %203, %v60
    %v205 = vpop.permute.xlu0 %204
    %207 = vset.pattern.permute.xlu0 2
    %208 = vperm.xlu0 %207, %v61
    %v209 = vpop.permute.xlu0 %208
    %211 = vset.pattern.permute.xlu0 2
    %212 = vperm.xlu0 %211, %v62
    %v213 = vpop.permute.xlu0 %212
    %v215 = vadd.f32 %v167, %v185
    %v216 = vadd.f32 %v168, %v185
    %v217 = vadd.f32 %v169, %v189
    %v218 = vadd.f32 %v170, %v189
    %v219 = vadd.f32 %v171, %v193
    %v220 = vadd.f32 %v172, %v193
    %v221 = vadd.f32 %v173, %v197
    %v222 = vadd.f32 %v174, %v197
    %v223 = vadd.f32 %v175, %v201
    %v224 = vadd.f32 %v176, %v201
    %v225 = vadd.f32 %v177, %v205
    %v226 = vadd.f32 %v178, %v205
    %v227 = vadd.f32 %v179, %v209
    %v228 = vadd.f32 %v180, %v209
    %v229 = vadd.f32 %v181, %v213
    %v230 = vadd.f32 %v182, %v213
    %v231 = vand.u32 2147483647, %v215
    %v232 = vand.u32 2147483647, %v216
    %v233 = vand.u32 2147483647, %v217
    %v234 = vand.u32 2147483647, %v218
    %v235 = vand.u32 2147483647, %v219
    %v236 = vand.u32 2147483647, %v220
    %v237 = vand.u32 2147483647, %v221
    %v238 = vand.u32 2147483647, %v222
    %v239 = vand.u32 2147483647, %v223
    %v240 = vand.u32 2147483647, %v224
    %v241 = vand.u32 2147483647, %v225
    %v242 = vand.u32 2147483647, %v226
    %v243 = vand.u32 2147483647, %v227
    %v244 = vand.u32 2147483647, %v228
    %v245 = vand.u32 2147483647, %v229
    %v246 = vand.u32 2147483647, %v230
    %v247 = vsub.f32 1.0, %v231
    %v248 = vsub.f32 1.0, %v232
    %v249 = vsub.f32 1.0, %v233
    %v250 = vsub.f32 1.0, %v234
    %v251 = vsub.f32 1.0, %v235
    %v252 = vsub.f32 1.0, %v236
    %v253 = vsub.f32 1.0, %v237
    %v254 = vsub.f32 1.0, %v238
    %v255 = vsub.f32 1.0, %v239
    %v256 = vsub.f32 1.0, %v240
    %v257 = vsub.f32 1.0, %v241
    %v258 = vsub.f32 1.0, %v242
    %v259 = vsub.f32 1.0, %v243
    %v260 = vsub.f32 1.0, %v244
    %v261 = vsub.f32 1.0, %v245
    %v262 = vsub.f32 1.0, %v246
    %v263 = vmax.f32 %v247, 0.0
    %v264 = vmax.f32 %v248, 0.0
    %v265 = vmax.f32 %v249, 0.0
    %v266 = vmax.f32 %v250, 0.0
    %v267 = vmax.f32 %v251, 0.0
    %v268 = vmax.f32 %v252, 0.0
    %v269 = vmax.f32 %v253, 0.0
    %v270 = vmax.f32 %v254, 0.0
    %v271 = vmax.f32 %v255, 0.0
    %v272 = vmax.f32 %v256, 0.0
    %v273 = vmax.f32 %v257, 0.0
    %v274 = vmax.f32 %v258, 0.0
    %v275 = vmax.f32 %v259, 0.0
    %v276 = vmax.f32 %v260, 0.0
    %v277 = vmax.f32 %v261, 0.0
    %v278 = vmax.f32 %v262, 0.0
    %279 = vset.pattern.permute.xlu0 3
    %280 = vperm.xlu0 %279, %v55
    %v281 = vpop.permute.xlu0 %280
    %283 = vset.pattern.permute.xlu0 3
    %284 = vperm.xlu0 %283, %v56
    %v285 = vpop.permute.xlu0 %284
    %287 = vset.pattern.permute.xlu0 3
    %288 = vperm.xlu0 %287, %v57
    %v289 = vpop.permute.xlu0 %288
    %291 = vset.pattern.permute.xlu0 3
    %292 = vperm.xlu0 %291, %v58
    %v293 = vpop.permute.xlu0 %292
    %295 = vset.pattern.permute.xlu0 3
    %296 = vperm.xlu0 %295, %v59
    %v297 = vpop.permute.xlu0 %296
    %299 = vset.pattern.permute.xlu0 3
    %300 = vperm.xlu0 %299, %v60
    %v301 = vpop.permute.xlu0 %300
    %303 = vset.pattern.permute.xlu0 3
    %304 = vperm.xlu0 %303, %v61
    %v305 = vpop.permute.xlu0 %304
    %307 = vset.pattern.permute.xlu0 3
    %308 = vperm.xlu0 %307, %v62
    %v309 = vpop.permute.xlu0 %308
    %v311 = vmul.f32 %v281, %v35
    %v312 = vmul.f32 %v281, %v39
    %v313 = vmul.f32 %v285, %v35
    %v314 = vmul.f32 %v285, %v39
    %v315 = vmul.f32 %v289, %v35
    %v316 = vmul.f32 %v289, %v39
    %v317 = vmul.f32 %v293, %v35
    %v318 = vmul.f32 %v293, %v39
    %v319 = vmul.f32 %v297, %v35
    %v320 = vmul.f32 %v297, %v39
    %v321 = vmul.f32 %v301, %v35
    %v322 = vmul.f32 %v301, %v39
    %v323 = vmul.f32 %v305, %v35
    %v324 = vmul.f32 %v305, %v39
    %v325 = vmul.f32 %v309, %v35
    %v326 = vmul.f32 %v309, %v39
    %327 = vset.pattern.permute.xlu0 4
    %328 = vperm.xlu0 %327, %v55
    %v329 = vpop.permute.xlu0 %328
    %331 = vset.pattern.permute.xlu0 4
    %332 = vperm.xlu0 %331, %v56
    %v333 = vpop.permute.xlu0 %332
    %335 = vset.pattern.permute.xlu0 4
    %336 = vperm.xlu0 %335, %v57
    %v337 = vpop.permute.xlu0 %336
    %339 = vset.pattern.permute.xlu0 4
    %340 = vperm.xlu0 %339, %v58
    %v341 = vpop.permute.xlu0 %340
    %343 = vset.pattern.permute.xlu0 4
    %344 = vperm.xlu0 %343, %v59
    %v345 = vpop.permute.xlu0 %344
    %347 = vset.pattern.permute.xlu0 4
    %348 = vperm.xlu0 %347, %v60
    %v349 = vpop.permute.xlu0 %348
    %351 = vset.pattern.permute.xlu0 4
    %352 = vperm.xlu0 %351, %v61
    %v353 = vpop.permute.xlu0 %352
    %355 = vset.pattern.permute.xlu0 4
    %356 = vperm.xlu0 %355, %v62
    %v357 = vpop.permute.xlu0 %356
    %v359 = vmul.f32 %v329, %v48
    %v360 = vmul.f32 %v329, %v52
    %v361 = vmul.f32 %v333, %v48
    %v362 = vmul.f32 %v333, %v52
    %v363 = vmul.f32 %v337, %v48
    %v364 = vmul.f32 %v337, %v52
    %v365 = vmul.f32 %v341, %v48
    %v366 = vmul.f32 %v341, %v52
    %v367 = vmul.f32 %v345, %v48
    %v368 = vmul.f32 %v345, %v52
    %v369 = vmul.f32 %v349, %v48
    %v370 = vmul.f32 %v349, %v52
    %v371 = vmul.f32 %v353, %v48
    %v372 = vmul.f32 %v353, %v52
    %v373 = vmul.f32 %v357, %v48
    %v374 = vmul.f32 %v357, %v52
    %v375 = vadd.f32 %v311, %v359
    %v376 = vadd.f32 %v312, %v360
    %v377 = vadd.f32 %v313, %v361
    %v378 = vadd.f32 %v314, %v362
    %v379 = vadd.f32 %v315, %v363
    %v380 = vadd.f32 %v316, %v364
    %v381 = vadd.f32 %v317, %v365
    %v382 = vadd.f32 %v318, %v366
    %v383 = vadd.f32 %v319, %v367
    %v384 = vadd.f32 %v320, %v368
    %v385 = vadd.f32 %v321, %v369
    %v386 = vadd.f32 %v322, %v370
    %v387 = vadd.f32 %v323, %v371
    %v388 = vadd.f32 %v324, %v372
    %v389 = vadd.f32 %v325, %v373
    %v390 = vadd.f32 %v326, %v374
    %391 = vset.pattern.permute.xlu0 5
    %392 = vperm.xlu0 %391, %v55
    %v393 = vpop.permute.xlu0 %392
    %395 = vset.pattern.permute.xlu0 5
    %396 = vperm.xlu0 %395, %v56
    %v397 = vpop.permute.xlu0 %396
    %399 = vset.pattern.permute.xlu0 5
    %400 = vperm.xlu0 %399, %v57
    %v401 = vpop.permute.xlu0 %400
    %403 = vset.pattern.permute.xlu0 5
    %404 = vperm.xlu0 %403, %v58
    %v405 = vpop.permute.xlu0 %404
    %407 = vset.pattern.permute.xlu0 5
    %408 = vperm.xlu0 %407, %v59
    %v409 = vpop.permute.xlu0 %408
    %411 = vset.pattern.permute.xlu0 5
    %412 = vperm.xlu0 %411, %v60
    %v413 = vpop.permute.xlu0 %412
    %415 = vset.pattern.permute.xlu0 5
    %416 = vperm.xlu0 %415, %v61
    %v417 = vpop.permute.xlu0 %416
    %419 = vset.pattern.permute.xlu0 5
    %420 = vperm.xlu0 %419, %v62
    %v421 = vpop.permute.xlu0 %420
    %v423 = vadd.f32 %v375, %v393
    %v424 = vadd.f32 %v376, %v393
    %v425 = vadd.f32 %v377, %v397
    %v426 = vadd.f32 %v378, %v397
    %v427 = vadd.f32 %v379, %v401
    %v428 = vadd.f32 %v380, %v401
    %v429 = vadd.f32 %v381, %v405
    %v430 = vadd.f32 %v382, %v405
    %v431 = vadd.f32 %v383, %v409
    %v432 = vadd.f32 %v384, %v409
    %v433 = vadd.f32 %v385, %v413
    %v434 = vadd.f32 %v386, %v413
    %v435 = vadd.f32 %v387, %v417
    %v436 = vadd.f32 %v388, %v417
    %v437 = vadd.f32 %v389, %v421
    %v438 = vadd.f32 %v390, %v421
    %v439 = vand.u32 2147483647, %v423
    %v440 = vand.u32 2147483647, %v424
    %v441 = vand.u32 2147483647, %v425
    %v442 = vand.u32 2147483647, %v426
    %v443 = vand.u32 2147483647, %v427
    %v444 = vand.u32 2147483647, %v428
    %v445 = vand.u32 2147483647, %v429
    %v446 = vand.u32 2147483647, %v430
    %v447 = vand.u32 2147483647, %v431
    %v448 = vand.u32 2147483647, %v432
    %v449 = vand.u32 2147483647, %v433
    %v450 = vand.u32 2147483647, %v434
    %v451 = vand.u32 2147483647, %v435
    %v452 = vand.u32 2147483647, %v436
    %v453 = vand.u32 2147483647, %v437
    %v454 = vand.u32 2147483647, %v438
    %v455 = vsub.f32 1.0, %v439
    %v456 = vsub.f32 1.0, %v440
    %v457 = vsub.f32 1.0, %v441
    %v458 = vsub.f32 1.0, %v442
    %v459 = vsub.f32 1.0, %v443
    %v460 = vsub.f32 1.0, %v444
    %v461 = vsub.f32 1.0, %v445
    %v462 = vsub.f32 1.0, %v446
    %v463 = vsub.f32 1.0, %v447
    %v464 = vsub.f32 1.0, %v448
    %v465 = vsub.f32 1.0, %v449
    %v466 = vsub.f32 1.0, %v450
    %v467 = vsub.f32 1.0, %v451
    %v468 = vsub.f32 1.0, %v452
    %v469 = vsub.f32 1.0, %v453
    %v470 = vsub.f32 1.0, %v454
    %v471 = vmax.f32 %v455, 0.0
    %v472 = vmax.f32 %v456, 0.0
    %v473 = vmax.f32 %v457, 0.0
    %v474 = vmax.f32 %v458, 0.0
    %v475 = vmax.f32 %v459, 0.0
    %v476 = vmax.f32 %v460, 0.0
    %v477 = vmax.f32 %v461, 0.0
    %v478 = vmax.f32 %v462, 0.0
    %v479 = vmax.f32 %v463, 0.0
    %v480 = vmax.f32 %v464, 0.0
    %v481 = vmax.f32 %v465, 0.0
    %v482 = vmax.f32 %v466, 0.0
    %v483 = vmax.f32 %v467, 0.0
    %v484 = vmax.f32 %v468, 0.0
    %v485 = vmax.f32 %v469, 0.0
    %v486 = vmax.f32 %v470, 0.0
    %v487 = vld [vmem:[%s2] sm:$0xff]
    %v488 = vld [vmem:[%s2 + $0x8] sm:$0xff]
    %v489 = vld [vmem:[%s2 + $0x10] sm:$0xff]
    %v490 = vld [vmem:[%s2 + $0x18] sm:$0xff]
    %v491 = vld [vmem:[%s2 + $0x20] sm:$0xff]
    %v492 = vld [vmem:[%s2 + $0x28] sm:$0xff]
    %v493 = vld [vmem:[%s2 + $0x30] sm:$0xff]
    %v494 = vld [vmem:[%s2 + $0x38] sm:$0xff]
    %vm495 = vcmask 523264
    %v497 = vsel %vm495, %v487, 0
    %v500 = vsel %vm495, %v488, 0
    %v503 = vsel %vm495, %v489, 0
    %v506 = vsel %vm495, %v490, 0
    %v509 = vsel %vm495, %v491, 0
    %v512 = vsel %vm495, %v492, 0
    %v515 = vsel %vm495, %v493, 0
    %v518 = vsel %vm495, %v494, 0
    %520 = vmatprep.subr.mxu0 0.0
    %521 = vmatpush1.msra.mxu0 0.0
    %522 = vmatprep.subr.mxu0 0.0
    %523 = vmatpush1.msra.mxu0 0.0
    %524 = vmatprep.subr.mxu0 0.0
    %525 = vmatpush1.msra.mxu0 0.0
    %526 = vmatprep.subr.mxu0 0.0
    %527 = vmatpush1.msra.mxu0 0.0
    %528 = vmatprep.subr.mxu0 0.0
    %529 = vmatpush1.msra.mxu0 0.0
    %530 = vmatprep.subr.mxu0 0.0
    %531 = vmatpush1.msra.mxu0 0.0
    %532 = vmatprep.subr.mxu0 0.0
    %533 = vmatpush1.msra.mxu0 0.0
    %534 = vmatprep.subr.mxu0 0.0
    %535 = vmatpush1.msra.mxu0 0.0
    %536 = vmatprep.subr.mxu0 %v278
    %537 = vmatpush1.msra.mxu0 %v277
    %538 = vmatprep.subr.mxu0 %v276
    %539 = vmatpush1.msra.mxu0 %v275
    %540 = vmatprep.subr.mxu0 %v274
    %541 = vmatpush1.msra.mxu0 %v273
    %542 = vmatprep.subr.mxu0 %v272
    %543 = vmatpush1.msra.mxu0 %v271
    %544 = vmatprep.subr.mxu0 %v270
    %545 = vmatpush1.msra.mxu0 %v269
    %546 = vmatprep.subr.mxu0 %v268
    %547 = vmatpush1.msra.mxu0 %v267
    %548 = vmatprep.subr.mxu0 %v266
    %549 = vmatpush1.msra.mxu0 %v265
    %550 = vmatprep.subr.mxu0 %v264
    %551 = vmatpush1.msra.mxu0 %v263
    %552 = vmatprep.subr.mxu0 0.0
    %553 = vmatpush2.msra.mxu0 0.0
    %554 = vmatprep.subr.mxu0 0.0
    %555 = vmatpush2.msra.mxu0 0.0
    %556 = vmatprep.subr.mxu0 0.0
    %557 = vmatpush2.msra.mxu0 0.0
    %558 = vmatprep.subr.mxu0 0.0
    %559 = vmatpush2.msra.mxu0 0.0
    %560 = vmatprep.subr.mxu0 0.0
    %561 = vmatpush2.msra.mxu0 0.0
    %562 = vmatprep.subr.mxu0 0.0
    %563 = vmatpush2.msra.mxu0 0.0
    %564 = vmatprep.subr.mxu0 0.0
    %565 = vmatpush2.msra.mxu0 0.0
    %566 = vmatprep.subr.mxu0 0.0
    %567 = vmatpush2.msra.mxu0 0.0
    %568 = vmatprep.subr.mxu0 0.0
    %569 = vmatpush2.msra.mxu0 0.0
    %570 = vmatprep.subr.mxu0 0.0
    %571 = vmatpush2.msra.mxu0 0.0
    %572 = vmatprep.subr.mxu0 0.0
    %573 = vmatpush2.msra.mxu0 0.0
    %574 = vmatprep.subr.mxu0 0.0
    %575 = vmatpush2.msra.mxu0 0.0
    %576 = vmatprep.subr.mxu0 0.0
    %577 = vmatpush2.msra.mxu0 0.0
    %578 = vmatprep.subr.mxu0 0.0
    %579 = vmatpush2.msra.mxu0 0.0
    %580 = vmatprep.subr.mxu0 0.0
    %581 = vmatpush2.msra.mxu0 0.0
    %582 = vmatprep.subr.mxu0 0.0
    %583 = vmatpush2.msra.mxu0 0.0
    %584 = vmatprep.mubr.f32.mxu0 0.0
    %585 = vmatmul.mubr.f32.gmra.mxu0 %v497
    %v586 = vpop.f32.mrf.mxu0
    %v587 = vadd.f32 0.0, %v586
    %v588 = vpop.f32.mrf.mxu0
    %v589 = vadd.f32 0.0, %v588
    %590 = vmatprep.mubr.f32.mxu0 0.0
    %591 = vmatmul.mubr.f32.gmra.mxu0 %v500
    %v592 = vpop.f32.mrf.mxu0
    %v593 = vadd.f32 0.0, %v592
    %v594 = vpop.f32.mrf.mxu0
    %v595 = vadd.f32 0.0, %v594
    %596 = vmatprep.mubr.f32.mxu0 0.0
    %597 = vmatmul.mubr.f32.gmra.mxu0 %v503
    %v598 = vpop.f32.mrf.mxu0
    %v599 = vadd.f32 0.0, %v598
    %v600 = vpop.f32.mrf.mxu0
    %v601 = vadd.f32 0.0, %v600
    %602 = vmatprep.mubr.f32.mxu0 0.0
    %603 = vmatmul.mubr.f32.gmra.mxu0 %v506
    %v604 = vpop.f32.mrf.mxu0
    %v605 = vadd.f32 0.0, %v604
    %v606 = vpop.f32.mrf.mxu0
    %v607 = vadd.f32 0.0, %v606
    %608 = vmatprep.mubr.f32.mxu0 0.0
    %609 = vmatmul.mubr.f32.gmra.mxu0 %v509
    %v610 = vpop.f32.mrf.mxu0
    %v611 = vadd.f32 0.0, %v610
    %v612 = vpop.f32.mrf.mxu0
    %v613 = vadd.f32 0.0, %v612
    %614 = vmatprep.mubr.f32.mxu0 0.0
    %615 = vmatmul.mubr.f32.gmra.mxu0 %v512
    %v616 = vpop.f32.mrf.mxu0
    %v617 = vadd.f32 0.0, %v616
    %v618 = vpop.f32.mrf.mxu0
    %v619 = vadd.f32 0.0, %v618
    %620 = vmatprep.mubr.f32.mxu0 0.0
    %621 = vmatmul.mubr.f32.gmra.mxu0 %v515
    %v622 = vpop.f32.mrf.mxu0
    %v623 = vadd.f32 0.0, %v622
    %v624 = vpop.f32.mrf.mxu0
    %v625 = vadd.f32 0.0, %v624
    %626 = vmatprep.mubr.f32.mxu0 0.0
    %627 = vmatmul.mubr.f32.gmra.mxu0 %v518
    %v628 = vpop.f32.mrf.mxu0
    %v629 = vadd.f32 0.0, %v628
    %v630 = vpop.f32.mrf.mxu0
    %v631 = vadd.f32 0.0, %v630
    %632 = vdwg.mxu0
    %v633 = vld [vmem:[%s3] sm:$0xff]
    %v634 = vmul.f32 %v471, %v587
    %v635 = vmul.f32 %v472, %v589
    %v636 = vmul.f32 %v473, %v593
    %v637 = vmul.f32 %v474, %v595
    %v638 = vmul.f32 %v475, %v599
    %v639 = vmul.f32 %v476, %v601
    %v640 = vmul.f32 %v477, %v605
    %v641 = vmul.f32 %v478, %v607
    %v642 = vmul.f32 %v479, %v611
    %v643 = vmul.f32 %v480, %v613
    %v644 = vmul.f32 %v481, %v617
    %v645 = vmul.f32 %v482, %v619
    %v646 = vmul.f32 %v483, %v623
    %v647 = vmul.f32 %v484, %v625
    %v648 = vmul.f32 %v485, %v629
    %v649 = vmul.f32 %v486, %v631
    %v651 = vsel %vm495, %v633, 0
    %653 = vmatprep.subr.mxu0 0.0
    %654 = vmatpush1.msra.mxu0 0.0
    %655 = vmatprep.subr.mxu0 0.0
    %656 = vmatpush1.msra.mxu0 0.0
    %657 = vmatprep.subr.mxu0 0.0
    %658 = vmatpush1.msra.mxu0 0.0
    %659 = vmatprep.subr.mxu0 0.0
    %660 = vmatpush1.msra.mxu0 0.0
    %661 = vmatprep.subr.mxu0 0.0
    %662 = vmatpush1.msra.mxu0 0.0
    %663 = vmatprep.subr.mxu0 0.0
    %664 = vmatpush1.msra.mxu0 0.0
    %665 = vmatprep.subr.mxu0 0.0
    %666 = vmatpush1.msra.mxu0 0.0
    %667 = vmatprep.subr.mxu0 0.0
    %668 = vmatpush1.msra.mxu0 0.0
    %669 = vmatprep.subr.mxu0 %v649
    %670 = vmatpush1.msra.mxu0 %v648
    %671 = vmatprep.subr.mxu0 %v647
    %672 = vmatpush1.msra.mxu0 %v646
    %673 = vmatprep.subr.mxu0 %v645
    %674 = vmatpush1.msra.mxu0 %v644
    %675 = vmatprep.subr.mxu0 %v643
    %676 = vmatpush1.msra.mxu0 %v642
    %677 = vmatprep.subr.mxu0 %v641
    %678 = vmatpush1.msra.mxu0 %v640
    %679 = vmatprep.subr.mxu0 %v639
    %680 = vmatpush1.msra.mxu0 %v638
    %681 = vmatprep.subr.mxu0 %v637
    %682 = vmatpush1.msra.mxu0 %v636
    %683 = vmatprep.subr.mxu0 %v635
    %684 = vmatpush1.msra.mxu0 %v634
    %685 = vmatprep.subr.mxu0 0.0
    %686 = vmatpush2.msra.mxu0 0.0
    %687 = vmatprep.subr.mxu0 0.0
    %688 = vmatpush2.msra.mxu0 0.0
    %689 = vmatprep.subr.mxu0 0.0
    %690 = vmatpush2.msra.mxu0 0.0
    %691 = vmatprep.subr.mxu0 0.0
    %692 = vmatpush2.msra.mxu0 0.0
    %693 = vmatprep.subr.mxu0 0.0
    %694 = vmatpush2.msra.mxu0 0.0
    %695 = vmatprep.subr.mxu0 0.0
    %696 = vmatpush2.msra.mxu0 0.0
    %697 = vmatprep.subr.mxu0 0.0
    %698 = vmatpush2.msra.mxu0 0.0
    %699 = vmatprep.subr.mxu0 0.0
    %700 = vmatpush2.msra.mxu0 0.0
    %701 = vmatprep.subr.mxu0 0.0
    %702 = vmatpush2.msra.mxu0 0.0
    %703 = vmatprep.subr.mxu0 0.0
    %704 = vmatpush2.msra.mxu0 0.0
    %705 = vmatprep.subr.mxu0 0.0
    %706 = vmatpush2.msra.mxu0 0.0
    %707 = vmatprep.subr.mxu0 0.0
    %708 = vmatpush2.msra.mxu0 0.0
    %709 = vmatprep.subr.mxu0 0.0
    %710 = vmatpush2.msra.mxu0 0.0
    %711 = vmatprep.subr.mxu0 0.0
    %712 = vmatpush2.msra.mxu0 0.0
    %713 = vmatprep.subr.mxu0 0.0
    %714 = vmatpush2.msra.mxu0 0.0
    %715 = vmatprep.subr.mxu0 0.0
    %716 = vmatpush2.msra.mxu0 0.0
    %717 = vmatprep.mubr.f32.mxu0 0.0
    %718 = vmatmul.mubr.f32.gmra.mxu0 %v651
    %v719 = vpop.f32.mrf.mxu0
    %v720 = vadd.f32 0.0, %v719
    %v721 = vpop.f32.mrf.mxu0
    %v722 = vadd.f32 0.0, %v721
    %723 = vdwg.mxu0
    %724 = vst [vmem:[#allocation5] sm:$0xff] %v720
    %725 = vst [vmem:[#allocation5 + $0x8] sm:$0xff] %v722
    // Predicated region
    $region22: #{tpu_custom_call.1} parent=1 // pred_check
      _
    $region23: #{tpu_custom_call.1} parent=1 // pred_check_branch
      %727 = sbr.rel (0) target = $region25
    $region24: #{tpu_custom_call.1} parent=1 // pred_region
      %s729 = ssub.s32 256, 256
      %730 = vsyncadd [#allocation4], %s729
      %s732 = sshll.u32 [#allocation5], 4
      %s733 = int_to_ptr.vmem [resolvable:$true] %s732
      %735 = dma.vmem_to_hbm [thread:$0]  %s733, 256, %s4, [#allocation4]
    $region25: #{tpu_custom_call.1} parent=1 // pred_fallthru
      _
    // Predicated region
    $region26: #{tpu_custom_call.1} parent=1 // pred_check
      _
    $region27: #{tpu_custom_call.1} parent=1 // pred_check_branch
      %737 = sbr.rel (0) target = $region29
    $region28: #{tpu_custom_call.1} parent=1 // pred_region
      %738 = dma.done [#allocation4], 256
    $region29: #{tpu_custom_call.1} parent=1 // pred_fallthru
      _
    %739 = vsyncpa [#allocation3], 1
    %740 = vsyncpa [#allocation4], 1

</llo_original>
